<compile_context>
chip_gen: v6e
topology: v6e:2x2x1
jax: 0.10.0
libtpu: 0.0.40
codegen_flags: <defaults>
</compile_context>

<pallas_src>
import jax
import jax.numpy as jnp
from jax import lax
from jax.experimental import pallas as pl
from jax.experimental.pallas import tpu as pltpu


# Contract over dim 0 of the LHS (the seq_len axis) -> fuses permute(0,2,1)
# into the matmul itself (transposed-LHS feed into the MXU).
_DN = (((0,), (0,)), ((), ()))


def _make_kernel(has_mark, compute_dtype):
    """Build the kernel body.  One matmul + one full-block store per batch."""
    if has_mark:
        def kernel(x_ref, m_ref, w_ref, b_ref, o_ref):
            # x_ref: (Bt, L, N)   m_ref: (Bt, L, F)
            # w_ref: (L, D) in compute_dtype (cast once in the wrapper)
            # b_ref: (1, D) f32   o_ref: (Bt, V, D)
            w = w_ref[...]
            b = b_ref[...]          # loaded once; (1,D)+(V,D) add broadcasts
            bt = x_ref.shape[0]     # static

            def body(bi, carry):
                # Single lane-axis concat -> one MXU launch + one store.
                tok = jnp.concatenate([x_ref[bi], m_ref[bi]], axis=1)  # (L, V)
                if tok.dtype != compute_dtype:
                    tok = tok.astype(compute_dtype)
                # TODO(synk): verify via pl.lower_as_mlir that this
                # transposed-LHS dot does not emit a per-operand vxpose on the
                # target chip; concatenating first already merges any such
                # transpose into one per batch.
                acc = lax.dot_general(
                    tok, w, _DN, preferred_element_type=jnp.float32)   # (V, D)
                o_ref[bi] = (acc + b).astype(o_ref.dtype)
                return carry

            # fori_loop (not Python unroll) keeps vreg pressure flat as
            # batch_tile grows; trip count is static and small.
            lax.fori_loop(0, bt, body, 0)
    else:
        def kernel(x_ref, w_ref, b_ref, o_ref):
            # x_ref: (Bt, L, N)  w_ref: (L, D)  b_ref: (1, D)  o_ref: (Bt, N, D)
            w = w_ref[...]
            b = b_ref[...]
            bt = x_ref.shape[0]

            def body(bi, carry):
                tok = x_ref[bi]                                        # (L, N)
                if tok.dtype != compute_dtype:
                    tok = tok.astype(compute_dtype)
                acc = lax.dot_general(
                    tok, w, _DN, preferred_element_type=jnp.float32)   # (N, D)
                o_ref[bi] = (acc + b).astype(o_ref.dtype)
                return carry

            lax.fori_loop(0, bt, body, 0)
    return kernel


def _pick_batch_tile(B, per_batch_bytes, static_bytes,
                     budget_bytes=24 << 20, cap=16):
    """Largest divisor of B under the VMEM budget, keeping grid >= 2 (even
    preferred) so both v7x TensorCores get work on the 'parallel' axis."""
    candidates = []
    for bt in range(1, min(B, cap) + 1):
        if B % bt:
            continue
        steps = B // bt
        if B >= 2 and steps < 2:          # never batch_tile == B when B >= 2
            continue
        if static_bytes + bt * per_batch_bytes > budget_bytes:
            continue
        candidates.append(bt)
    if not candidates:
        return 1
    even = [bt for bt in candidates if (B // bt) % 2 == 0]
    return max(even) if even else max(candidates)


def data_embedding_inverted(x, x_mark, weight, bias, *,
                            compute_dtype=None, batch_tile=None,
                            single_buffer_params=False):
    """Pallas forward of DataEmbedding_inverted.

    Args:
      x:       [B, L, N] activations.
      x_mark:  [B, L, F] time features or None.
      weight:  [L, D]  (transpose of the PyTorch nn.Linear weight [D, L]).
      bias:    [D].
      compute_dtype: MXU operand dtype (e.g. jnp.bfloat16 on v6e/v7x); the
        weight is cast once in the wrapper, accumulation is always f32.
        Defaults to x.dtype.
      batch_tile: batches per grid step (must divide B); None = auto-select.
      single_buffer_params: single-buffer the constant-indexed weight/bias
        blocks (pl.Buffered(1)) to reclaim VMEM on tight (v7x) configs.
    Returns:
      [B, N(+F), D] in x.dtype.
    """
    B, L, N = x.shape
    Lw, D = weight.shape
    if Lw != L:
        raise ValueError(f"weight first dim {Lw} must equal seq_len {L}")
    if compute_dtype is None:
        compute_dtype = x.dtype

    has_mark = x_mark is not None
    Fm = x_mark.shape[2] if has_mark else 0
    V = N + Fm
    out_dtype = x.dtype

    # One-time wrapper-side parameter prep (no per-grid-step in-kernel casts).
    w = weight.astype(compute_dtype)
    bias2d = bias.reshape(1, D).astype(jnp.float32)
    if has_mark and x_mark.dtype != x.dtype:
        x_mark = x_mark.astype(x.dtype)

    # VMEM footprint of the pipelined (double-buffered) blocks per batch.
    x_bytes = jnp.dtype(x.dtype).itemsize
    o_bytes = jnp.dtype(out_dtype).itemsize
    per_batch = 2 * (L * V * x_bytes + V * D * o_bytes)
    static = 2 * (L * D * jnp.dtype(compute_dtype).itemsize + D * 4)

    if batch_tile is None:
        batch_tile = _pick_batch_tile(B, per_batch, static)
    if B % batch_tile != 0:
        raise ValueError(f"batch_tile={batch_tile} must divide B={B}")
    grid = (B // batch_tile,)

    # Constant-indexed params: fetched once across the whole grid.
    pm = {"pipeline_mode": pl.Buffered(1)} if single_buffer_params else {}
    w_spec = pl.BlockSpec((L, D), lambda b: (0, 0), **pm)
    b_spec = pl.BlockSpec((1, D), lambda b: (0, 0), **pm)

    kernel = _make_kernel(has_mark, compute_dtype)
    if has_mark:
        in_specs = [
            pl.BlockSpec((batch_tile, L, N), lambda b: (b, 0, 0)),
            pl.BlockSpec((batch_tile, L, Fm), lambda b: (b, 0, 0)),
            w_spec,
            b_spec,
        ]
        args = (x, x_mark, w, bias2d)
    else:
        in_specs = [
            pl.BlockSpec((batch_tile, L, N), lambda b: (b, 0, 0)),
            w_spec,
            b_spec,
        ]
        args = (x, w, bias2d)

    out = pl.pallas_call(
        kernel,
        out_shape=jax.ShapeDtypeStruct((B, V, D), out_dtype),
        grid_spec=pltpu.PrefetchScalarGridSpec(
            num_scalar_prefetch=0,
            grid=grid,
            in_specs=in_specs,
            out_specs=pl.BlockSpec((batch_tile, V, D), lambda b: (b, 0, 0)),
        ),
        compiler_params=pltpu.CompilerParams(
            dimension_semantics=("parallel",),
        ),
    )(*args)

    # Dropout(p=0.1) is identity in inference mode.
    # TODO(synk): training-mode dropout (pltpu.prng_* mask) not implemented.
    return out


def _reference(x, x_mark, weight, bias):
    tokens = jnp.transpose(x, (0, 2, 1))
    if x_mark is not None:
        tokens = jnp.concatenate(
            [tokens, jnp.transpose(x_mark, (0, 2, 1))], axis=1)
    return jnp.einsum("bvl,ld->bvd", tokens, weight) + bias


if __name__ == "__main__":
    # Small shapes: batch=2, seq_len (c_in)=8, variates=4, time-features=3,
    # d_model=32.
    B, L, N, Fm, D = 2, 8, 4, 3, 32

    key = jax.random.PRNGKey(0)
    kx, km, kw, kb = jax.random.split(key, 4)

    x = jax.random.normal(kx, (B, L, N), dtype=jnp.float32)
    x_mark = jax.random.normal(km, (B, L, Fm), dtype=jnp.float32)

    # Deterministic parameter init mimicking nn.Linear(c_in=L, d_model=D):
    # uniform(-1/sqrt(L), 1/sqrt(L)) for both weight and bias.
    bound = 1.0 / (L ** 0.5)
    weight = jax.random.uniform(kw, (L, D), minval=-bound, maxval=bound,
                                dtype=jnp.float32)
    bias = jax.random.uniform(kb, (D,), minval=-bound, maxval=bound,
                              dtype=jnp.float32)

    ref = _reference(x, x_mark, weight, bias)
    ref_nomark = _reference(x, None, weight, bias)

    # 1) f32 path, auto batch_tile (keeps grid=2 -> both v7x TCs get work).
    out = jax.block_until_ready(data_embedding_inverted(x, x_mark, weight, bias))
    assert out.shape == (B, N + Fm, D), out.shape
    assert jnp.allclose(out, ref, atol=1e-5, rtol=1e-5), "f32 mismatch"

    # 2) bf16-operand path (weight cast once in wrapper), f32 accumulate.
    out_bf16 = jax.block_until_ready(
        data_embedding_inverted(x, x_mark, weight, bias,
                                compute_dtype=jnp.bfloat16))
    assert jnp.allclose(out_bf16, ref, atol=3e-2, rtol=3e-2), "bf16 mismatch"

    # 3) explicit batch_tile (amortizes per-grid-step overhead for large B).
    out_bt = jax.block_until_ready(
        data_embedding_inverted(x, x_mark, weight, bias, batch_tile=2))
    assert jnp.allclose(out_bt, ref, atol=1e-5, rtol=1e-5), "batch_tile mismatch"

    # 4) x_mark=None path.
    out_nm = jax.block_until_ready(data_embedding_inverted(x, None, weight, bias))
    assert out_nm.shape == (B, N, D), out_nm.shape
    assert jnp.allclose(out_nm, ref_nomark, atol=1e-5,
                        rtol=1e-5), "no-mark mismatch"

    print("KERNEL_OK")
</pallas_src>

<mosaic_0001>
module attributes {stable_mosaic.version = 11 : i64} {
  func.func @kernel(%arg0: i32, %arg1: memref<1x8x4xf32, #tpu.memory_space<vmem>>, %arg2: memref<1x8x3xf32, #tpu.memory_space<vmem>>, %arg3: memref<8x32xf32, #tpu.memory_space<vmem>>, %arg4: memref<1x32xf32, #tpu.memory_space<vmem>>, %arg5: memref<1x7x32xf32, #tpu.memory_space<vmem>>) attributes {dimension_semantics = [#tpu.dimension_semantics<parallel>], iteration_bounds = array<i64: 2>, scalar_prefetch = 0 : i64, scratch_operands = 0 : i64, tpu.core_type = #tpu.core_type<tc>, window_params = [{transform_indices = @transform_0, window_bounds = array<i64: 1, 8, 4>}, {transform_indices = @transform_1, window_bounds = array<i64: 1, 8, 3>}, {pipeline_mode = #tpu.pipeline_mode<synchronous>, transform_indices = @transform_2, window_bounds = array<i64: 8, 32>}, {pipeline_mode = #tpu.pipeline_mode<synchronous>, transform_indices = @transform_3, window_bounds = array<i64: 1, 32>}, {transform_indices = @transform_4, window_bounds = array<i64: 1, 7, 32>}]} {
    %c0 = arith.constant 0 : index
    %c0_0 = arith.constant 0 : index
    %0 = vector.load %arg3[%c0, %c0_0] : memref<8x32xf32, #tpu.memory_space<vmem>>, vector<8x32xf32>
    %c0_1 = arith.constant 0 : index
    %c0_2 = arith.constant 0 : index
    %1 = vector.load %arg4[%c0_1, %c0_2] : memref<1x32xf32, #tpu.memory_space<vmem>>, vector<1x32xf32>
    %c0_i32 = arith.constant 0 : i32
    %2 = arith.index_cast %c0_i32 : i32 to index
    %c0_3 = arith.constant 0 : index
    %c0_4 = arith.constant 0 : index
    %3 = vector.load %arg1[%2, %c0_3, %c0_4] : memref<1x8x4xf32, #tpu.memory_space<vmem>>, vector<1x8x4xf32>
    %4 = vector.shape_cast %3 : vector<1x8x4xf32> to vector<8x4xf32>
    %5 = arith.index_cast %c0_i32 : i32 to index
    %c0_5 = arith.constant 0 : index
    %c0_6 = arith.constant 0 : index
    %6 = vector.load %arg2[%5, %c0_5, %c0_6] : memref<1x8x3xf32, #tpu.memory_space<vmem>>, vector<1x8x3xf32>
    %7 = vector.shape_cast %6 : vector<1x8x3xf32> to vector<8x3xf32>
    %8 = tpu.concatenate %4, %7 in 1 : vector<8x4xf32>, vector<8x3xf32> -> vector<8x7xf32>
    %cst = arith.constant dense<0.000000e+00> : vector<7x32xf32>
    %9 = tpu.matmul %8, %0, %cst {dimension_numbers = #tpu.dot_dimension_numbers<[0], [0], [1], [1], [0, 1, 1, 1], [], []>} : vector<8x7xf32>, vector<8x32xf32>, vector<7x32xf32> -> vector<7x32xf32>
    %10 = vector.broadcast %1 : vector<1x32xf32> to vector<7x32xf32>
    %11 = arith.addf %9, %10 : vector<7x32xf32>
    %12 = arith.index_cast %c0_i32 : i32 to index
    %c0_7 = arith.constant 0 : index
    %c0_8 = arith.constant 0 : index
    %13 = vector.load %arg5[%12, %c0_7, %c0_8] : memref<1x7x32xf32, #tpu.memory_space<vmem>>, vector<1x7x32xf32>
    %14 = vector.shape_cast %13 : vector<1x7x32xf32> to vector<7x32xf32>
    %15 = vector.shape_cast %11 : vector<7x32xf32> to vector<1x7x32xf32>
    tpu.vector_store %arg5[%12, %c0_7, %c0_8], %15 {strides = array<i32>} : memref<1x7x32xf32, #tpu.memory_space<vmem>>, vector<1x7x32xf32>,
    %c1_i32 = arith.constant 1 : i32
    return
  }
  func.func @transform_0(%arg0: i32) -> (i32, i32, i32) {
    %c0_i32 = arith.constant 0 : i32
    %c0_i32_0 = arith.constant 0 : i32
    %c0_i32_1 = arith.constant 0 : i32
    return %arg0, %c0_i32, %c0_i32_0 : i32, i32, i32
  }
  func.func @transform_1(%arg0: i32) -> (i32, i32, i32) {
    %c0_i32 = arith.constant 0 : i32
    %c0_i32_0 = arith.constant 0 : i32
    %c0_i32_1 = arith.constant 0 : i32
    return %arg0, %c0_i32, %c0_i32_0 : i32, i32, i32
  }
  func.func @transform_2(%arg0: i32) -> (i32, i32) {
    %c0_i32 = arith.constant 0 : i32
    %c0_i32_0 = arith.constant 0 : i32
    %c0_i32_1 = arith.constant 0 : i32
    return %c0_i32, %c0_i32_0 : i32, i32
  }
  func.func @transform_3(%arg0: i32) -> (i32, i32) {
    %c0_i32 = arith.constant 0 : i32
    %c0_i32_0 = arith.constant 0 : i32
    %c0_i32_1 = arith.constant 0 : i32
    return %c0_i32, %c0_i32_0 : i32, i32
  }
  func.func @transform_4(%arg0: i32) -> (i32, i32, i32) {
    %c0_i32 = arith.constant 0 : i32
    %c0_i32_0 = arith.constant 0 : i32
    %c0_i32_1 = arith.constant 0 : i32
    return %arg0, %c0_i32, %c0_i32_0 : i32, i32, i32
  }
}

</mosaic_0001>

<llo_original>
// kernel: tpu_custom_call.1
$region0: #{tpu_custom_call.1}
  #allocation0 [shape = 'u32[]', space=smem, size = 0x4, offset = 0x4, fixed_abs, tag = 'smem constant byte address 0x4 - core index']
  #allocation1 [shape = 'u32[144,128]{1,0:T(1,128)}', space=vmem, size = 0x12000, scoped, tag = 'internal scratch']
  %s0 = inlined_call_operand.vmem [shape: f32[2,8,4], index: 0, kind: input, shape index: {}]
  %s1 = inlined_call_operand.vmem [shape: f32[2,8,3], index: 1, kind: input, shape index: {}]
  %s2 = inlined_call_operand.vmem [shape: f32[8,32], index: 2, kind: input, shape index: {}]
  %s3 = inlined_call_operand.vmem [shape: f32[1,32], index: 3, kind: input, shape index: {}]
  %s4 = inlined_call_operand.vmem [shape: f32[2,7,32], index: 4, kind: output, shape index: {}]
  %s5 = sld [smem:[#allocation0]]
  $region49: #{tpu_custom_call.1} parent=0
    _
  %s7 = ssub.s32 1, %s5
  %s8 = scalar_select 0, %s7, %s5
  loop: start=0, step=1, limit=4
  $region2: #{tpu_custom_call.1} parent=0 // loop_pre_header
    _
  $region3: #{tpu_custom_call.1} parent=0 // loop_header
    %s10 = sphi 0, %s14
    %p11 = scmp.ge.s32.totalorder %s10, 4
    %s20 = sphi 0, %s22
    %s23 = sphi 0, %s20
    %s24 = sphi 0, %s23
    %s40 = sphi 0, %s24
    %s46 = sphi 0, %s48
    %s49 = sphi 0, %s46
    %s50 = sphi 0, %s49
    %s66 = sphi 0, %s50
    %s70 = sphi 0, %s70
    %s72 = sphi 0, %s70
    %s73 = sphi 0, %s72
    %s87 = sphi 0, %s73
    %s91 = sphi 0, %s91
    %s93 = sphi 0, %s91
    %s94 = sphi 0, %s93
    %s108 = sphi 0, %s94
    %s114 = sphi 0, %s116
    %s117 = sphi 0, %s114
    %s118 = sphi 0, %s117
    %s134 = sphi 0, %s118
  $region4: #{tpu_custom_call.1} parent=0 // loop_header_branch
    %13 = sbr.rel (%p11) target = $region8
  $region5: #{tpu_custom_call.1} parent=0 // loop_body
    %s15 = ssub.s32 %s10, 1
    %s16 = ssub.s32 %s10, 2
    %s17 = sadd.s32 %s10, 1
    %s18 = ssub.s32 %s10, %s17
    %p19 = scmp.eq.s32.totalorder %s18, 0
    %s21 = sadd.s32 %s20, 1
    %s22 = scalar_select %p19, %s20, %s21
    %p25 = pneg %p19
    %p26 = scmp.eq.s32.totalorder %s10, 1
    %p27 = por %p25, %p26
    %p28 = scmp.ne.s32.totalorder %s20, %s23
    %p29 = scmp.eq.s32.totalorder %s10, 0
    %p30 = por %p28, %p29
    %p31 = scmp.ne.s32.totalorder %s20, %s23
    %p32 = scmp.eq.s32.totalorder %s15, 1
    %p33 = por %p31, %p32
    %p34 = scmp.ne.s32.totalorder %s23, %s24
    %p35 = scmp.eq.s32.totalorder %s15, 0
    %p36 = por %p34, %p35
    %p37 = scmp.ne.s32.totalorder %s23, %s24
    %p38 = scmp.eq.s32.totalorder %s16, 1
    %p39 = por %p37, %p38
    %p41 = scmp.ne.s32.totalorder %s24, %s40
    %p42 = scmp.eq.s32.totalorder %s16, 0
    %p43 = por %p41, %p42
    %s44 = ssub.s32 %s10, %s17
    %p45 = scmp.eq.s32.totalorder %s44, 0
    %s47 = sadd.s32 %s46, 1
    %s48 = scalar_select %p45, %s46, %s47
    %p51 = pneg %p45
    %p52 = scmp.eq.s32.totalorder %s10, 1
    %p53 = por %p51, %p52
    %p54 = scmp.ne.s32.totalorder %s46, %s49
    %p55 = scmp.eq.s32.totalorder %s10, 0
    %p56 = por %p54, %p55
    %p57 = scmp.ne.s32.totalorder %s46, %s49
    %p58 = scmp.eq.s32.totalorder %s15, 1
    %p59 = por %p57, %p58
    %p60 = scmp.ne.s32.totalorder %s49, %s50
    %p61 = scmp.eq.s32.totalorder %s15, 0
    %p62 = por %p60, %p61
    %p63 = scmp.ne.s32.totalorder %s49, %s50
    %p64 = scmp.eq.s32.totalorder %s16, 1
    %p65 = por %p63, %p64
    %p67 = scmp.ne.s32.totalorder %s50, %s66
    %p68 = scmp.eq.s32.totalorder %s16, 0
    %p69 = por %p67, %p68
    %s71 = sadd.s32 %s70, 1
    %p74 = scmp.eq.s32.totalorder %s10, 1
    %p75 = scmp.ne.s32.totalorder %s70, %s72
    %p76 = scmp.eq.s32.totalorder %s10, 0
    %p77 = por %p75, %p76
    %p78 = scmp.ne.s32.totalorder %s70, %s72
    %p79 = scmp.eq.s32.totalorder %s15, 1
    %p80 = por %p78, %p79
    %p81 = scmp.ne.s32.totalorder %s72, %s73
    %p82 = scmp.eq.s32.totalorder %s15, 0
    %p83 = por %p81, %p82
    %p84 = scmp.ne.s32.totalorder %s72, %s73
    %p85 = scmp.eq.s32.totalorder %s16, 1
    %p86 = por %p84, %p85
    %p88 = scmp.ne.s32.totalorder %s73, %s87
    %p89 = scmp.eq.s32.totalorder %s16, 0
    %p90 = por %p88, %p89
    %s92 = sadd.s32 %s91, 1
    %p95 = scmp.eq.s32.totalorder %s10, 1
    %p96 = scmp.ne.s32.totalorder %s91, %s93
    %p97 = scmp.eq.s32.totalorder %s10, 0
    %p98 = por %p96, %p97
    %p99 = scmp.ne.s32.totalorder %s91, %s93
    %p100 = scmp.eq.s32.totalorder %s15, 1
    %p101 = por %p99, %p100
    %p102 = scmp.ne.s32.totalorder %s93, %s94
    %p103 = scmp.eq.s32.totalorder %s15, 0
    %p104 = por %p102, %p103
    %p105 = scmp.ne.s32.totalorder %s93, %s94
    %p106 = scmp.eq.s32.totalorder %s16, 1
    %p107 = por %p105, %p106
    %p109 = scmp.ne.s32.totalorder %s94, %s108
    %p110 = scmp.eq.s32.totalorder %s16, 0
    %p111 = por %p109, %p110
    %s112 = ssub.s32 %s10, %s17
    %p113 = scmp.eq.s32.totalorder %s112, 0
    %s115 = sadd.s32 %s114, 1
    %s116 = scalar_select %p113, %s114, %s115
    %p119 = pneg %p113
    %p120 = scmp.eq.s32.totalorder %s10, 1
    %p121 = por %p119, %p120
    %p122 = scmp.ne.s32.totalorder %s114, %s117
    %p123 = scmp.eq.s32.totalorder %s10, 0
    %p124 = por %p122, %p123
    %p125 = scmp.ne.s32.totalorder %s114, %s117
    %p126 = scmp.eq.s32.totalorder %s15, 1
    %p127 = por %p125, %p126
    %p128 = scmp.ne.s32.totalorder %s117, %s118
    %p129 = scmp.eq.s32.totalorder %s15, 0
    %p130 = por %p128, %p129
    %p131 = scmp.ne.s32.totalorder %s117, %s118
    %p132 = scmp.eq.s32.totalorder %s16, 1
    %p133 = por %p131, %p132
    %p135 = scmp.ne.s32.totalorder %s118, %s134
    %p136 = scmp.eq.s32.totalorder %s16, 0
    %p137 = por %p135, %p136
    %p138 = scmp.le.s32.totalorder 1, %s10
    %p139 = scmp.lt.s32.totalorder %s10, 3
    %p140 = pnand %p138, %p139
    %p141 = pneg %p140
    // Predicated region
    $region9: #{tpu_custom_call.1} parent=5 // pred_check
      _
    $region10: #{tpu_custom_call.1} parent=5 // pred_check_branch
      %143 = sbr.rel (%p140) target = $region12
    $region11: #{tpu_custom_call.1} parent=5 // pred_region
      %s144 = ssub.s32 %s10, 1
      // Predicated region
      $region13: #{tpu_custom_call.1} parent=11 // pred_check
        %p145 = pneg %p83
      $region14: #{tpu_custom_call.1} parent=11 // pred_check_branch
        %147 = sbr.rel (%p145) target = $region16
      $region15: #{tpu_custom_call.1} parent=11 // pred_region
        _
      $region16: #{tpu_custom_call.1} parent=11 // pred_fallthru
        _
      // Predicated region
      $region17: #{tpu_custom_call.1} parent=11 // pred_check
        %p148 = pneg %p104
      $region18: #{tpu_custom_call.1} parent=11 // pred_check_branch
        %150 = sbr.rel (%p148) target = $region20
      $region19: #{tpu_custom_call.1} parent=11 // pred_region
        _
      $region20: #{tpu_custom_call.1} parent=11 // pred_fallthru
        _
    $region12: #{tpu_custom_call.1} parent=5 // pred_fallthru
      _
    %p151 = scmp.lt.s32.totalorder %s10, 2
    // Predicated region
    $region21: #{tpu_custom_call.1} parent=5 // pred_check
      %p152 = pneg %p151
    $region22: #{tpu_custom_call.1} parent=5 // pred_check_branch
      %154 = sbr.rel (%p152) target = $region24
    $region23: #{tpu_custom_call.1} parent=5 // pred_region
      // Predicated region
      $region25: #{tpu_custom_call.1} parent=23 // pred_check
        %p155 = pneg %p30
      $region26: #{tpu_custom_call.1} parent=23 // pred_check_branch
        %157 = sbr.rel (%p155) target = $region28
      $region27: #{tpu_custom_call.1} parent=23 // pred_region
        %p158 = scmp.lt.s32.totalorder %s10, 1
        %s159 = scalar_select %p158, %s10, 1
        %s160 = smul.addr %s159, 8
        %s161 = scalar_lea.vmem %s0, %s160
      $region28: #{tpu_custom_call.1} parent=23 // pred_fallthru
        _
      // Predicated region
      $region29: #{tpu_custom_call.1} parent=23 // pred_check
        %p162 = pneg %p56
      $region30: #{tpu_custom_call.1} parent=23 // pred_check_branch
        %164 = sbr.rel (%p162) target = $region32
      $region31: #{tpu_custom_call.1} parent=23 // pred_region
        %p165 = scmp.lt.s32.totalorder %s10, 1
        %s166 = scalar_select %p165, %s10, 1
        %s167 = smul.addr %s166, 8
        %s168 = scalar_lea.vmem %s1, %s167
      $region32: #{tpu_custom_call.1} parent=23 // pred_fallthru
        _
    $region24: #{tpu_custom_call.1} parent=5 // pred_fallthru
      _
    %p169 = scmp.le.s32.totalorder 1, %s10
    %p170 = scmp.lt.s32.totalorder %s10, 3
    %p171 = pnand %p169, %p170
    %p172 = pneg %p171
    // Predicated region
    $region33: #{tpu_custom_call.1} parent=5 // pred_check
      _
    $region34: #{tpu_custom_call.1} parent=5 // pred_check_branch
      %174 = sbr.rel (%p171) target = $region36
    $region35: #{tpu_custom_call.1} parent=5 // pred_region
      %s175 = ssub.s32 %s10, 1
      %p176 = scmp.lt.s32.totalorder %s15, 1
      %s177 = scalar_select %p176, %s15, 1
      %s178 = smul.addr %s177, 8
      %s179 = scalar_lea.vmem %s0, %s178
      %p180 = pneg %p36
      %p181 = pneg %p33
      %p182 = scmp.lt.s32.totalorder %s15, 1
      %s183 = scalar_select %p182, %s15, 1
      %s184 = smul.addr %s183, 8
      %s185 = scalar_lea.vmem %s1, %s184
      %p186 = pneg %p62
      %p187 = pneg %p59
      %p188 = pneg %p83
      %p189 = pneg %p80
      %p190 = pneg %p104
      %p191 = pneg %p101
      %p192 = pneg %p130
      %p193 = pneg %p127
      %p194 = scmp.lt.s32.totalorder %s15, 1
      %s195 = scalar_select %p194, %s15, 1
      %s196 = smul.addr %s195, 8
      %s197 = scalar_lea.vmem %s4, %s196
      %p198 = scmp.lt.s32.totalorder %s15, 1
      %s199 = scalar_select %p198, %s15, 1
      %s200 = smul.addr %s199, 8
      %s201 = scalar_lea.vmem %s0, %s200
      %p202 = scmp.lt.s32.totalorder %s15, 1
      %s203 = scalar_select %p202, %s15, 1
      %s204 = smul.addr %s203, 8
      %s205 = scalar_lea.vmem %s1, %s204
      %p206 = scmp.lt.s32.totalorder %s15, 1
      %s207 = scalar_select %p206, %s15, 1
      %s208 = smul.addr %s207, 8
      %s209 = scalar_lea.vmem %s4, %s208
      %v210 = vld [vmem:[%s2] sm:$0xff]
      %v211 = vld [vmem:[%s3] sm:$0x1]
      %v212 = vld [vmem:[%s201] sm:$0xff]
      %v213 = vld [vmem:[%s205] sm:$0xff]
      %215 = vrot.lane.b32.xlu0 %v213, 4
      %v216 = vpop.permute.xlu0 %215
      %vm218 = vcmask 31744
      %v219 = vsel %vm218, %v212, %v216
      %v221 = vlaneseq
      %v222 = vshrl.u32 %v221, 7
      %v223 = vsub.s32 0, %v222
      %v224 = vrot.slane %v211, %v223
      %226 = vxpose.xlu0.b32.start [1/16] %v219, 128
      %227 = vxpose.xlu0.b32.cont [2/16] 0.0, 128
      %228 = vxpose.xlu0.b32.cont [3/16] 0.0, 128
      %229 = vxpose.xlu0.b32.cont [4/16] 0.0, 128
      %230 = vxpose.xlu0.b32.cont [5/16] 0.0, 128
      %231 = vxpose.xlu0.b32.cont [6/16] 0.0, 128
      %232 = vxpose.xlu0.b32.cont [7/16] 0.0, 128
      %233 = vxpose.xlu0.b32.cont [8/16] 0.0, 128
      %234 = vxpose.xlu0.b32.cont [9/16] 0.0, 128
      %235 = vxpose.xlu0.b32.cont [10/16] 0.0, 128
      %236 = vxpose.xlu0.b32.cont [11/16] 0.0, 128
      %237 = vxpose.xlu0.b32.cont [12/16] 0.0, 128
      %238 = vxpose.xlu0.b32.cont [13/16] 0.0, 128
      %239 = vxpose.xlu0.b32.cont [14/16] 0.0, 128
      %240 = vxpose.xlu0.b32.cont [15/16] 0.0, 128
      %241 = vxpose.xlu0.b32.end [16/16] 0.0, 128
      %v242 = vpop.trf.xlu0
      %v243 = vpop.trf.xlu0
      %v244 = vpop.trf.xlu0
      %v245 = vpop.trf.xlu0
      %v246 = vpop.trf.xlu0
      %v247 = vpop.trf.xlu0
      %v248 = vpop.trf.xlu0
      %v249 = vpop.trf.xlu0
      %v250 = vpop.trf.xlu0
      %v251 = vpop.trf.xlu0
      %v252 = vpop.trf.xlu0
      %v253 = vpop.trf.xlu0
      %v254 = vpop.trf.xlu0
      %v255 = vpop.trf.xlu0
      %v256 = vpop.trf.xlu0
      %v257 = vpop.trf.xlu0
      %vm258 = vcmask 64512
      %v260 = vsel %vm258, %v242, 0
      %262 = vmatprep.subr.mxu0 0.0
      %263 = vmatpush1.msra.mxu0 0.0
      %264 = vmatprep.subr.mxu0 0.0
      %265 = vmatpush1.msra.mxu0 0.0
      %266 = vmatprep.subr.mxu0 0.0
      %267 = vmatpush1.msra.mxu0 0.0
      %268 = vmatprep.subr.mxu0 0.0
      %269 = vmatpush1.msra.mxu0 0.0
      %270 = vmatprep.subr.mxu0 0.0
      %271 = vmatpush1.msra.mxu0 0.0
      %272 = vmatprep.subr.mxu0 0.0
      %273 = vmatpush1.msra.mxu0 0.0
      %274 = vmatprep.subr.mxu0 0.0
      %275 = vmatpush1.msra.mxu0 0.0
      %276 = vmatprep.subr.mxu0 0.0
      %277 = vmatpush1.msra.mxu0 0.0
      %278 = vmatprep.subr.mxu0 0.0
      %279 = vmatpush1.msra.mxu0 0.0
      %280 = vmatprep.subr.mxu0 0.0
      %281 = vmatpush1.msra.mxu0 0.0
      %282 = vmatprep.subr.mxu0 0.0
      %283 = vmatpush1.msra.mxu0 0.0
      %284 = vmatprep.subr.mxu0 0.0
      %285 = vmatpush1.msra.mxu0 0.0
      %286 = vmatprep.subr.mxu0 0.0
      %287 = vmatpush1.msra.mxu0 0.0
      %288 = vmatprep.subr.mxu0 0.0
      %289 = vmatpush1.msra.mxu0 0.0
      %290 = vmatprep.subr.mxu0 0.0
      %291 = vmatpush1.msra.mxu0 0.0
      %292 = vmatprep.subr.mxu0 0.0
      %293 = vmatpush1.msra.mxu0 %v210
      %294 = vmatprep.subr.mxu0 0.0
      %295 = vmatpush2.msra.mxu0 0.0
      %296 = vmatprep.subr.mxu0 0.0
      %297 = vmatpush2.msra.mxu0 0.0
      %298 = vmatprep.subr.mxu0 0.0
      %299 = vmatpush2.msra.mxu0 0.0
      %300 = vmatprep.subr.mxu0 0.0
      %301 = vmatpush2.msra.mxu0 0.0
      %302 = vmatprep.subr.mxu0 0.0
      %303 = vmatpush2.msra.mxu0 0.0
      %304 = vmatprep.subr.mxu0 0.0
      %305 = vmatpush2.msra.mxu0 0.0
      %306 = vmatprep.subr.mxu0 0.0
      %307 = vmatpush2.msra.mxu0 0.0
      %308 = vmatprep.subr.mxu0 0.0
      %309 = vmatpush2.msra.mxu0 0.0
      %310 = vmatprep.subr.mxu0 0.0
      %311 = vmatpush2.msra.mxu0 0.0
      %312 = vmatprep.subr.mxu0 0.0
      %313 = vmatpush2.msra.mxu0 0.0
      %314 = vmatprep.subr.mxu0 0.0
      %315 = vmatpush2.msra.mxu0 0.0
      %316 = vmatprep.subr.mxu0 0.0
      %317 = vmatpush2.msra.mxu0 0.0
      %318 = vmatprep.subr.mxu0 0.0
      %319 = vmatpush2.msra.mxu0 0.0
      %320 = vmatprep.subr.mxu0 0.0
      %321 = vmatpush2.msra.mxu0 0.0
      %322 = vmatprep.subr.mxu0 0.0
      %323 = vmatpush2.msra.mxu0 0.0
      %324 = vmatprep.subr.mxu0 0.0
      %325 = vmatpush2.msra.mxu0 0.0
      %326 = vmatprep.mubr.f32.mxu0 0.0
      %327 = vmatmul.mubr.f32.gmra.mxu0 %v260
      %v328 = vpop.f32.mrf.mxu0
      %v329 = vadd.f32 %v224, %v328
      %v330 = vpop.f32.mrf.mxu0
      %331 = vdwg.mxu0
      %vm332 = vcmask 260096
      %333 = vst.msk [vmem:[%s209] sm:$0x7f] %vm332, %v329
      %p334 = scmp.lt.s32.totalorder %s15, 1
      %s335 = scalar_select %p334, %s15, 1
      %s336 = smul.addr %s335, 8
      %s337 = scalar_lea.vmem %s4, %s336
      // Predicated region
      $region37: #{tpu_custom_call.1} parent=35 // pred_check
        %p338 = pneg %p127
      $region38: #{tpu_custom_call.1} parent=35 // pred_check_branch
        %340 = sbr.rel (%p338) target = $region40
      $region39: #{tpu_custom_call.1} parent=35 // pred_region
        _
      $region40: #{tpu_custom_call.1} parent=35 // pred_fallthru
        _
    $region36: #{tpu_custom_call.1} parent=5 // pred_fallthru
      _
    %p341 = scmp.le.s32.totalorder 2, %s10
    // Predicated region
    $region41: #{tpu_custom_call.1} parent=5 // pred_check
      %p342 = pneg %p341
    $region42: #{tpu_custom_call.1} parent=5 // pred_check_branch
      %344 = sbr.rel (%p342) target = $region44
    $region43: #{tpu_custom_call.1} parent=5 // pred_region
      %s345 = ssub.s32 %s10, 2
      // Predicated region
      $region45: #{tpu_custom_call.1} parent=43 // pred_check
        %p346 = pneg %p133
      $region46: #{tpu_custom_call.1} parent=43 // pred_check_branch
        %348 = sbr.rel (%p346) target = $region48
      $region47: #{tpu_custom_call.1} parent=43 // pred_region
        %p349 = scmp.lt.s32.totalorder %s16, 1
        %s350 = scalar_select %p349, %s16, 1
        %s351 = smul.addr %s350, 8
        %s352 = scalar_lea.vmem %s4, %s351
      $region48: #{tpu_custom_call.1} parent=43 // pred_fallthru
        _
    $region44: #{tpu_custom_call.1} parent=5 // pred_fallthru
      _
  $region6: #{tpu_custom_call.1} parent=0 // loop_footer
    %s14 = sadd.s32 1, %s10
  $region7: #{tpu_custom_call.1} parent=0 // loop_footer_branch
    %9 = sbr.rel target = $region3
  $region8: #{tpu_custom_call.1} parent=0 // loop_exit
    _

</llo_original>
